<compile_context>
chip_gen: v7x
topology: tpu7x:2x2x1
jax: 0.10.0
libtpu: 0.0.40
codegen_flags: <defaults>
</compile_context>

<pallas_src>
import functools

import jax
import jax.numpy as jnp
from jax.experimental import pallas as pl
from jax.experimental.pallas import tpu as pltpu


def _round_up(a, b):
    return (a + b - 1) // b * b


def _mlp_kernel(x_ref, w1_ref, b1_ref, bn_ref, w2_ref, b2_ref, w3_ref, b3_ref, o_ref):
    """Fused Lin1 -> ReLU -> BN(folded) -> (Lin2 -> ReLU) x2 -> Lin3.

    x_ref:  (tm, Cin)        VMEM   batch tile
    w1_ref: (Cin, H)         VMEM   Lin1 weight, already transposed to (in, out)
    b1_ref: (1, H)           VMEM
    bn_ref: (2, H)           VMEM   row 0 = scale, row 1 = shift (folded BN)
    w2_ref: (H, H)           VMEM   Lin2 weight (used twice)
    b2_ref: (1, H)           VMEM
    w3_ref: (H, Cout_pad)    VMEM   Lin3 weight (lane-padded)
    b3_ref: (1, Cout_pad)    VMEM
    o_ref:  (tm, Cout_pad)   VMEM
    """
    x = x_ref[...]

    # Lin1 + ReLU
    h = jnp.dot(x, w1_ref[...], preferred_element_type=jnp.float32) + b1_ref[...]
    h = jnp.maximum(h, 0.0)

    # BatchNorm1d (inference, folded into scale/shift)
    scale = bn_ref[0:1, :]
    shift = bn_ref[1:2, :]
    h = h * scale + shift

    # Lin2 + ReLU, applied twice with the SAME weights (matches the PyTorch forward)
    w2 = w2_ref[...]
    b2 = b2_ref[...]
    h = jnp.maximum(jnp.dot(h, w2, preferred_element_type=jnp.float32) + b2, 0.0)
    h = jnp.maximum(jnp.dot(h, w2, preferred_element_type=jnp.float32) + b2, 0.0)

    # Lin3
    o = jnp.dot(h, w3_ref[...], preferred_element_type=jnp.float32) + b3_ref[...]
    o_ref[...] = o.astype(o_ref.dtype)


@functools.partial(jax.jit, static_argnames=("block_batch",))
def building_footprint_forward(x, w1, b1, gamma, beta, running_mean, running_var,
                               w2, b2, w3, b3, eps=1e-5, block_batch=256):
    """Forward pass of Building_footprint_part.

    x  : (N, C_in)                float32
    w1 : (256, C_in), b1 : (256,)                 -- Lin1 (PyTorch layout: (out, in))
    gamma, beta, running_mean, running_var : (256,)  -- BatchNorm1d(256)
    w2 : (256, 256),  b2 : (256,)                 -- Lin2
    w3 : (C_out, 256), b3 : (C_out,)              -- Lin3
    returns (N, C_out)
    """
    N, C_in = x.shape
    HID = w1.shape[0]
    C_out = w3.shape[0]

    f32 = jnp.float32

    # Fold BN into per-feature scale/shift (inference semantics); pack into one array.
    scale = gamma.astype(f32) * jax.lax.rsqrt(running_var.astype(f32) + eps)
    shift = beta.astype(f32) - running_mean.astype(f32) * scale
    bn = jnp.stack([scale, shift], axis=0)                      # (2, HID)

    # Transpose weights to (in, out) matmul layout.
    w1t = jnp.transpose(w1).astype(f32)                         # (C_in, HID)
    w2t = jnp.transpose(w2).astype(f32)                         # (HID, HID)
    w3t = jnp.transpose(w3).astype(f32)                         # (HID, C_out)

    # Lane-dense output: pad C_out up to a multiple of 128 lanes (zero columns).
    C_out_p = _round_up(C_out, 128)
    if C_out_p != C_out:
        w3t = jnp.pad(w3t, ((0, 0), (0, C_out_p - C_out)))
        b3p = jnp.pad(b3.astype(f32), (0, C_out_p - C_out))
    else:
        b3p = b3.astype(f32)

    # Batch tiling: pad N to a multiple of the batch tile (>= 8 sublanes).
    tm = min(block_batch, _round_up(N, 8))
    N_p = _round_up(N, tm)
    xp = x.astype(f32)
    if N_p != N:
        xp = jnp.pad(xp, ((0, N_p - N), (0, 0)))

    grid = (N_p // tm,)

    out = pl.pallas_call(
        _mlp_kernel,
        out_shape=jax.ShapeDtypeStruct((N_p, C_out_p), f32),
        grid_spec=pltpu.PrefetchScalarGridSpec(
            num_scalar_prefetch=0,
            grid=grid,
            in_specs=[
                pl.BlockSpec((tm, C_in), lambda i: (i, 0)),        # x tile
                pl.BlockSpec((C_in, HID), lambda i: (0, 0)),       # w1 (resident)
                pl.BlockSpec((1, HID), lambda i: (0, 0)),          # b1
                pl.BlockSpec((2, HID), lambda i: (0, 0)),          # bn scale/shift
                pl.BlockSpec((HID, HID), lambda i: (0, 0)),        # w2
                pl.BlockSpec((1, HID), lambda i: (0, 0)),          # b2
                pl.BlockSpec((HID, C_out_p), lambda i: (0, 0)),    # w3 (lane-padded)
                pl.BlockSpec((1, C_out_p), lambda i: (0, 0)),      # b3
            ],
            out_specs=pl.BlockSpec((tm, C_out_p), lambda i: (i, 0)),
        ),
        compiler_params=pltpu.CompilerParams(
            dimension_semantics=("parallel",)),
    )(xp, w1t, b1.astype(f32).reshape(1, HID), bn,
      w2t, b2.astype(f32).reshape(1, HID), w3t, b3p.reshape(1, C_out_p))

    # Drop batch and output-channel padding.
    return out[:N, :C_out]


def _reference(x, w1, b1, gamma, beta, running_mean, running_var, w2, b2, w3, b3, eps=1e-5):
    """Pure-JAX reference of the PyTorch forward (inference-mode BN)."""
    h = x @ w1.T + b1
    h = jnp.maximum(h, 0.0)
    scale = gamma * jax.lax.rsqrt(running_var + eps)
    h = (h - running_mean) * scale + beta
    h = jnp.maximum(h @ w2.T + b2, 0.0)
    h = jnp.maximum(h @ w2.T + b2, 0.0)
    return h @ w3.T + b3


if __name__ == "__main__":
    key = jax.random.PRNGKey(0)
    ks = jax.random.split(key, 11)

    N, C_in, C_out = 4, 32, 8
    HID = 256

    x = jax.random.normal(ks[0], (N, C_in), dtype=jnp.float32)

    w1 = jax.random.normal(ks[1], (HID, C_in), dtype=jnp.float32) * 0.1
    b1 = jax.random.normal(ks[2], (HID,), dtype=jnp.float32) * 0.1
    gamma = jax.random.uniform(ks[3], (HID,), minval=0.5, maxval=1.5, dtype=jnp.float32)
    beta = jax.random.normal(ks[4], (HID,), dtype=jnp.float32) * 0.1
    running_mean = jax.random.normal(ks[5], (HID,), dtype=jnp.float32) * 0.1
    running_var = jax.random.uniform(ks[6], (HID,), minval=0.5, maxval=1.5, dtype=jnp.float32)
    w2 = jax.random.normal(ks[7], (HID, HID), dtype=jnp.float32) * 0.05
    b2 = jax.random.normal(ks[8], (HID,), dtype=jnp.float32) * 0.1
    w3 = jax.random.normal(ks[9], (C_out, HID), dtype=jnp.float32) * 0.05
    b3 = jax.random.normal(ks[10], (C_out,), dtype=jnp.float32) * 0.1

    out = building_footprint_forward(x, w1, b1, gamma, beta, running_mean, running_var,
                                     w2, b2, w3, b3)
    out = jax.block_until_ready(out)

    ref = _reference(x, w1, b1, gamma, beta, running_mean, running_var, w2, b2, w3, b3)

    assert out.shape == (N, C_out), out.shape
    # Tolerance accounts for possible MXU bf16-pass accumulation-order differences
    # between the fused kernel and the XLA reference over K=256 reductions.
    assert jnp.allclose(out, ref, atol=1e-2, rtol=1e-2), float(jnp.max(jnp.abs(out - ref)))

    print("KERNEL_OK")
</pallas_src>

<mosaic_0001>
module attributes {stable_mosaic.version = 11 : i64} {
  func.func @_mlp_kernel(%arg0: i32, %arg1: memref<8x32xf32, #tpu.memory_space<vmem>>, %arg2: memref<32x256xf32, #tpu.memory_space<vmem>>, %arg3: memref<1x256xf32, #tpu.memory_space<vmem>>, %arg4: memref<2x256xf32, #tpu.memory_space<vmem>>, %arg5: memref<256x256xf32, #tpu.memory_space<vmem>>, %arg6: memref<1x256xf32, #tpu.memory_space<vmem>>, %arg7: memref<256x128xf32, #tpu.memory_space<vmem>>, %arg8: memref<1x128xf32, #tpu.memory_space<vmem>>, %arg9: memref<8x128xf32, #tpu.memory_space<vmem>>) attributes {dimension_semantics = [#tpu.dimension_semantics<parallel>], iteration_bounds = array<i64: 1>, scalar_prefetch = 0 : i64, scratch_operands = 0 : i64, tpu.core_type = #tpu.core_type<tc>, window_params = [{transform_indices = @transform_0, window_bounds = array<i64: 8, 32>}, {pipeline_mode = #tpu.pipeline_mode<synchronous>, transform_indices = @transform_1, window_bounds = array<i64: 32, 256>}, {pipeline_mode = #tpu.pipeline_mode<synchronous>, transform_indices = @transform_2, window_bounds = array<i64: 1, 256>}, {pipeline_mode = #tpu.pipeline_mode<synchronous>, transform_indices = @transform_3, window_bounds = array<i64: 2, 256>}, {pipeline_mode = #tpu.pipeline_mode<synchronous>, transform_indices = @transform_4, window_bounds = array<i64: 256, 256>}, {pipeline_mode = #tpu.pipeline_mode<synchronous>, transform_indices = @transform_5, window_bounds = array<i64: 1, 256>}, {pipeline_mode = #tpu.pipeline_mode<synchronous>, transform_indices = @transform_6, window_bounds = array<i64: 256, 128>}, {pipeline_mode = #tpu.pipeline_mode<synchronous>, transform_indices = @transform_7, window_bounds = array<i64: 1, 128>}, {transform_indices = @transform_8, window_bounds = array<i64: 8, 128>}]} {
    %c0 = arith.constant 0 : index
    %c0_0 = arith.constant 0 : index
    %0 = vector.load %arg1[%c0, %c0_0] : memref<8x32xf32, #tpu.memory_space<vmem>>, vector<8x32xf32>
    %c0_1 = arith.constant 0 : index
    %c0_2 = arith.constant 0 : index
    %1 = vector.load %arg2[%c0_1, %c0_2] : memref<32x256xf32, #tpu.memory_space<vmem>>, vector<32x256xf32>
    %cst = arith.constant dense<0.000000e+00> : vector<8x256xf32>
    %2 = tpu.matmul %0, %1, %cst {dimension_numbers = #tpu.dot_dimension_numbers<[1], [0], [0], [1], [0, 0, 1, 1], [], []>} : vector<8x32xf32>, vector<32x256xf32>, vector<8x256xf32> -> vector<8x256xf32>
    %c0_3 = arith.constant 0 : index
    %c0_4 = arith.constant 0 : index
    %3 = vector.load %arg3[%c0_3, %c0_4] : memref<1x256xf32, #tpu.memory_space<vmem>>, vector<1x256xf32>
    %4 = vector.broadcast %3 : vector<1x256xf32> to vector<8x256xf32>
    %5 = arith.addf %2, %4 : vector<8x256xf32>
    %cst_5 = arith.constant 0.000000e+00 : f32
    %6 = vector.broadcast %cst_5 : f32 to vector<8x256xf32>
    %7 = arith.maximumf %5, %6 : vector<8x256xf32>
    %c0_6 = arith.constant 0 : index
    %c0_7 = arith.constant 0 : index
    %8 = vector.load %arg4[%c0_6, %c0_7] : memref<2x256xf32, #tpu.memory_space<vmem>>, vector<1x256xf32>
    %c1 = arith.constant 1 : index
    %c0_8 = arith.constant 0 : index
    %9 = vector.load %arg4[%c1, %c0_8] : memref<2x256xf32, #tpu.memory_space<vmem>>, vector<1x256xf32>
    %10 = vector.broadcast %8 : vector<1x256xf32> to vector<8x256xf32>
    %11 = arith.mulf %7, %10 : vector<8x256xf32>
    %12 = vector.broadcast %9 : vector<1x256xf32> to vector<8x256xf32>
    %13 = arith.addf %11, %12 : vector<8x256xf32>
    %c0_9 = arith.constant 0 : index
    %c0_10 = arith.constant 0 : index
    %14 = vector.load %arg5[%c0_9, %c0_10] : memref<256x256xf32, #tpu.memory_space<vmem>>, vector<256x256xf32>
    %c0_11 = arith.constant 0 : index
    %c0_12 = arith.constant 0 : index
    %15 = vector.load %arg6[%c0_11, %c0_12] : memref<1x256xf32, #tpu.memory_space<vmem>>, vector<1x256xf32>
    %cst_13 = arith.constant dense<0.000000e+00> : vector<8x256xf32>
    %16 = tpu.matmul %13, %14, %cst_13 {dimension_numbers = #tpu.dot_dimension_numbers<[1], [0], [0], [1], [0, 0, 1, 1], [], []>} : vector<8x256xf32>, vector<256x256xf32>, vector<8x256xf32> -> vector<8x256xf32>
    %17 = vector.broadcast %15 : vector<1x256xf32> to vector<8x256xf32>
    %18 = arith.addf %16, %17 : vector<8x256xf32>
    %cst_14 = arith.constant 0.000000e+00 : f32
    %19 = vector.broadcast %cst_14 : f32 to vector<8x256xf32>
    %20 = arith.maximumf %18, %19 : vector<8x256xf32>
    %cst_15 = arith.constant dense<0.000000e+00> : vector<8x256xf32>
    %21 = tpu.matmul %20, %14, %cst_15 {dimension_numbers = #tpu.dot_dimension_numbers<[1], [0], [0], [1], [0, 0, 1, 1], [], []>} : vector<8x256xf32>, vector<256x256xf32>, vector<8x256xf32> -> vector<8x256xf32>
    %22 = vector.broadcast %15 : vector<1x256xf32> to vector<8x256xf32>
    %23 = arith.addf %21, %22 : vector<8x256xf32>
    %cst_16 = arith.constant 0.000000e+00 : f32
    %24 = vector.broadcast %cst_16 : f32 to vector<8x256xf32>
    %25 = arith.maximumf %23, %24 : vector<8x256xf32>
    %c0_17 = arith.constant 0 : index
    %c0_18 = arith.constant 0 : index
    %26 = vector.load %arg7[%c0_17, %c0_18] : memref<256x128xf32, #tpu.memory_space<vmem>>, vector<256x128xf32>
    %cst_19 = arith.constant dense<0.000000e+00> : vector<8x128xf32>
    %27 = tpu.matmul %25, %26, %cst_19 {dimension_numbers = #tpu.dot_dimension_numbers<[1], [0], [0], [1], [0, 0, 1, 1], [], []>} : vector<8x256xf32>, vector<256x128xf32>, vector<8x128xf32> -> vector<8x128xf32>
    %c0_20 = arith.constant 0 : index
    %c0_21 = arith.constant 0 : index
    %28 = vector.load %arg8[%c0_20, %c0_21] : memref<1x128xf32, #tpu.memory_space<vmem>>, vector<1x128xf32>
    %29 = vector.broadcast %28 : vector<1x128xf32> to vector<8x128xf32>
    %30 = arith.addf %27, %29 : vector<8x128xf32>
    %c0_22 = arith.constant 0 : index
    %c0_23 = arith.constant 0 : index
    %31 = vector.load %arg9[%c0_22, %c0_23] : memref<8x128xf32, #tpu.memory_space<vmem>>, vector<8x128xf32>
    tpu.vector_store %arg9[%c0_22, %c0_23], %30 {strides = array<i32>} : memref<8x128xf32, #tpu.memory_space<vmem>>, vector<8x128xf32>,
    return
  }
  func.func @transform_0(%arg0: i32) -> (i32, i32) {
    %c0_i32 = arith.constant 0 : i32
    %c0_i32_0 = arith.constant 0 : i32
    return %arg0, %c0_i32 : i32, i32
  }
  func.func @transform_1(%arg0: i32) -> (i32, i32) {
    %c0_i32 = arith.constant 0 : i32
    %c0_i32_0 = arith.constant 0 : i32
    %c0_i32_1 = arith.constant 0 : i32
    return %c0_i32, %c0_i32_0 : i32, i32
  }
  func.func @transform_2(%arg0: i32) -> (i32, i32) {
    %c0_i32 = arith.constant 0 : i32
    %c0_i32_0 = arith.constant 0 : i32
    %c0_i32_1 = arith.constant 0 : i32
    return %c0_i32, %c0_i32_0 : i32, i32
  }
  func.func @transform_3(%arg0: i32) -> (i32, i32) {
    %c0_i32 = arith.constant 0 : i32
    %c0_i32_0 = arith.constant 0 : i32
    %c0_i32_1 = arith.constant 0 : i32
    return %c0_i32, %c0_i32_0 : i32, i32
  }
  func.func @transform_4(%arg0: i32) -> (i32, i32) {
    %c0_i32 = arith.constant 0 : i32
    %c0_i32_0 = arith.constant 0 : i32
    %c0_i32_1 = arith.constant 0 : i32
    return %c0_i32, %c0_i32_0 : i32, i32
  }
  func.func @transform_5(%arg0: i32) -> (i32, i32) {
    %c0_i32 = arith.constant 0 : i32
    %c0_i32_0 = arith.constant 0 : i32
    %c0_i32_1 = arith.constant 0 : i32
    return %c0_i32, %c0_i32_0 : i32, i32
  }
  func.func @transform_6(%arg0: i32) -> (i32, i32) {
    %c0_i32 = arith.constant 0 : i32
    %c0_i32_0 = arith.constant 0 : i32
    %c0_i32_1 = arith.constant 0 : i32
    return %c0_i32, %c0_i32_0 : i32, i32
  }
  func.func @transform_7(%arg0: i32) -> (i32, i32) {
    %c0_i32 = arith.constant 0 : i32
    %c0_i32_0 = arith.constant 0 : i32
    %c0_i32_1 = arith.constant 0 : i32
    return %c0_i32, %c0_i32_0 : i32, i32
  }
  func.func @transform_8(%arg0: i32) -> (i32, i32) {
    %c0_i32 = arith.constant 0 : i32
    %c0_i32_0 = arith.constant 0 : i32
    return %arg0, %c0_i32 : i32, i32
  }
}

</mosaic_0001>

<llo_original>
// kernel: building_footprint_forward.1
$region0: #{building_footprint_forward.1}
  #allocation0 [shape = 'u32[]', space=smem, size = 0x4, offset = 0x4, fixed_abs, tag = 'smem constant byte address 0x4 - core index']
  #allocation1 [shape = 'u32[144,128]{1,0:T(1,128)}', space=vmem, size = 0x12000, scoped, tag = 'internal scratch']
  %s0 = inlined_call_operand.vmem [shape: f32[8,32], index: 0, kind: input, shape index: {}]
  %s1 = inlined_call_operand.vmem [shape: f32[32,256], index: 1, kind: input, shape index: {}]
  %s2 = inlined_call_operand.vmem [shape: f32[1,256], index: 2, kind: input, shape index: {}]
  %s3 = inlined_call_operand.vmem [shape: f32[2,256], index: 3, kind: input, shape index: {}]
  %s4 = inlined_call_operand.vmem [shape: f32[256,256], index: 4, kind: input, shape index: {}]
  %s5 = inlined_call_operand.vmem [shape: f32[1,256], index: 5, kind: input, shape index: {}]
  %s6 = inlined_call_operand.vmem [shape: f32[256,128], index: 6, kind: input, shape index: {}]
  %s7 = inlined_call_operand.vmem [shape: f32[1,128], index: 7, kind: input, shape index: {}]
  %s8 = inlined_call_operand.vmem [shape: f32[8,128], index: 8, kind: output, shape index: {}]
  %s9 = sld [smem:[#allocation0]]
  $region42: #{building_footprint_forward.1} parent=0
    _
  %s11 = ssub.s32 1, %s9
  %s12 = scalar_select 0, %s11, %s9
  // Predicated region
  $region2: #{building_footprint_forward.1} parent=0 // pred_check
    _
  $region3: #{building_footprint_forward.1} parent=0 // pred_check_branch
    %14 = sbr.rel (0) target = $region5
  $region4: #{building_footprint_forward.1} parent=0 // pred_region
    _
  $region5: #{building_footprint_forward.1} parent=0 // pred_fallthru
    _
  // Predicated region
  $region6: #{building_footprint_forward.1} parent=0 // pred_check
    _
  $region7: #{building_footprint_forward.1} parent=0 // pred_check_branch
    %16 = sbr.rel (0) target = $region9
  $region8: #{building_footprint_forward.1} parent=0 // pred_region
    _
  $region9: #{building_footprint_forward.1} parent=0 // pred_fallthru
    _
  // Predicated region
  $region10: #{building_footprint_forward.1} parent=0 // pred_check
    _
  $region11: #{building_footprint_forward.1} parent=0 // pred_check_branch
    %18 = sbr.rel (0) target = $region13
  $region12: #{building_footprint_forward.1} parent=0 // pred_region
    _
  $region13: #{building_footprint_forward.1} parent=0 // pred_fallthru
    _
  // Predicated region
  $region14: #{building_footprint_forward.1} parent=0 // pred_check
    _
  $region15: #{building_footprint_forward.1} parent=0 // pred_check_branch
    %20 = sbr.rel (0) target = $region17
  $region16: #{building_footprint_forward.1} parent=0 // pred_region
    _
  $region17: #{building_footprint_forward.1} parent=0 // pred_fallthru
    _
  // Predicated region
  $region18: #{building_footprint_forward.1} parent=0 // pred_check
    _
  $region19: #{building_footprint_forward.1} parent=0 // pred_check_branch
    %22 = sbr.rel (0) target = $region21
  $region20: #{building_footprint_forward.1} parent=0 // pred_region
    _
  $region21: #{building_footprint_forward.1} parent=0 // pred_fallthru
    _
  // Predicated region
  $region22: #{building_footprint_forward.1} parent=0 // pred_check
    _
  $region23: #{building_footprint_forward.1} parent=0 // pred_check_branch
    %24 = sbr.rel (0) target = $region25
  $region24: #{building_footprint_forward.1} parent=0 // pred_region
    _
  $region25: #{building_footprint_forward.1} parent=0 // pred_fallthru
    _
  // Predicated region
  $region26: #{building_footprint_forward.1} parent=0 // pred_check
    _
  $region27: #{building_footprint_forward.1} parent=0 // pred_check_branch
    %26 = sbr.rel (0) target = $region29
  $region28: #{building_footprint_forward.1} parent=0 // pred_region
    _
  $region29: #{building_footprint_forward.1} parent=0 // pred_fallthru
    _
  // Predicated region
  $region30: #{building_footprint_forward.1} parent=0 // pred_check
    _
  $region31: #{building_footprint_forward.1} parent=0 // pred_check_branch
    %28 = sbr.rel (0) target = $region33
  $region32: #{building_footprint_forward.1} parent=0 // pred_region
    _
  $region33: #{building_footprint_forward.1} parent=0 // pred_fallthru
    _
  %v29 = vld [vmem:[%s0] sm:$0xff]
  %v30 = vld [vmem:[%s1] sm:$0xff]
  %v31 = vld [vmem:[%s1 + $0x8] sm:$0xff]
  %v32 = vld [vmem:[%s1 + $0x10] sm:$0xff]
  %v33 = vld [vmem:[%s1 + $0x18] sm:$0xff]
  %v34 = vld [vmem:[%s1 + $0x20] sm:$0xff]
  %v35 = vld [vmem:[%s1 + $0x28] sm:$0xff]
  %v36 = vld [vmem:[%s1 + $0x30] sm:$0xff]
  %v37 = vld [vmem:[%s1 + $0x38] sm:$0xff]
  %v38 = vld [vmem:[%s2] sm:$0x3]
  %v40 = vlaneseq
  %v41 = vshrl.u32 %v40, 7
  %v42 = vsub.s32 0, %v41
  %v43 = vrot.slane %v38, %v42
  %v44 = vlaneseq
  %v45 = vshrl.u32 %v44, 7
  %v46 = vsub.s32 1, %v45
  %v47 = vrot.slane %v38, %v46
  %vm50 = vcmask 261120
  %v52 = vsel %vm50, %v29, 0
  %54 = vmatprep.subr.mxu0 %v31
  %55 = vmatpush1.msra.mxu0 %v30
  %56 = vmatprep.subr.mxu0 %v33
  %57 = vmatpush1.msra.mxu0 %v32
  %58 = vmatprep.subr.mxu0 %v35
  %59 = vmatpush1.msra.mxu0 %v34
  %60 = vmatprep.subr.mxu0 %v37
  %61 = vmatpush1.msra.mxu0 %v36
  %62 = vmatprep.subr.mxu0 0.0
  %63 = vmatpush1.msra.mxu0 0.0
  %64 = vmatprep.subr.mxu0 0.0
  %65 = vmatpush1.msra.mxu0 0.0
  %66 = vmatprep.subr.mxu0 0.0
  %67 = vmatpush1.msra.mxu0 0.0
  %68 = vmatprep.subr.mxu0 0.0
  %69 = vmatpush1.msra.mxu0 0.0
  %70 = vmatprep.subr.mxu0 0.0
  %71 = vmatpush1.msra.mxu0 0.0
  %72 = vmatprep.subr.mxu0 0.0
  %73 = vmatpush1.msra.mxu0 0.0
  %74 = vmatprep.subr.mxu0 0.0
  %75 = vmatpush1.msra.mxu0 0.0
  %76 = vmatprep.subr.mxu0 0.0
  %77 = vmatpush1.msra.mxu0 0.0
  %78 = vmatprep.subr.mxu0 0.0
  %79 = vmatpush1.msra.mxu0 0.0
  %80 = vmatprep.subr.mxu0 0.0
  %81 = vmatpush1.msra.mxu0 0.0
  %82 = vmatprep.subr.mxu0 0.0
  %83 = vmatpush1.msra.mxu0 0.0
  %84 = vmatprep.subr.mxu0 0.0
  %85 = vmatpush1.msra.mxu0 0.0
  %86 = vmatprep.subr.mxu0 0.0
  %87 = vmatpush1.msra.mxu0 0.0
  %88 = vmatprep.subr.mxu0 0.0
  %89 = vmatpush1.msra.mxu0 0.0
  %90 = vmatprep.subr.mxu0 0.0
  %91 = vmatpush1.msra.mxu0 0.0
  %92 = vmatprep.subr.mxu0 0.0
  %93 = vmatpush1.msra.mxu0 0.0
  %94 = vmatprep.subr.mxu0 0.0
  %95 = vmatpush1.msra.mxu0 0.0
  %96 = vmatprep.subr.mxu0 0.0
  %97 = vmatpush1.msra.mxu0 0.0
  %98 = vmatprep.subr.mxu0 0.0
  %99 = vmatpush1.msra.mxu0 0.0
  %100 = vmatprep.subr.mxu0 0.0
  %101 = vmatpush1.msra.mxu0 0.0
  %102 = vmatprep.subr.mxu0 0.0
  %103 = vmatpush1.msra.mxu0 0.0
  %104 = vmatprep.subr.mxu0 0.0
  %105 = vmatpush1.msra.mxu0 0.0
  %106 = vmatprep.subr.mxu0 0.0
  %107 = vmatpush1.msra.mxu0 0.0
  %108 = vmatprep.subr.mxu0 0.0
  %109 = vmatpush1.msra.mxu0 0.0
  %110 = vmatprep.subr.mxu0 0.0
  %111 = vmatpush1.msra.mxu0 0.0
  %112 = vmatprep.subr.mxu0 0.0
  %113 = vmatpush1.msra.mxu0 0.0
  %114 = vmatprep.subr.mxu0 0.0
  %115 = vmatpush1.msra.mxu0 0.0
  %116 = vmatprep.subr.mxu0 0.0
  %117 = vmatpush1.msra.mxu0 0.0
  %118 = vmatprep.mubr.f32.mxu0 0.0
  %119 = vmatmul.mubr.f32.gmra.mrb[0].mxu0 %v52
  %v120 = vpop.f32.mrb[0].mxu0
  %v121 = vadd.f32 %v43, %v120
  %v122 = vpop.f32.mrb[0].mxu0
  %v123 = vadd.f32 %v47, %v122
  %124 = vdwg.mxu0
  %v125 = vmax.f32 %v121, 0.0
  %v126 = vmax.f32 %v123, 0.0
  %v127 = vld [vmem:[%s3] ss:$2 sm:$0x3]
  %s128 = scalar_lea.vmem %s3, 1
  %v129 = vld [vmem:[%s128] ss:$2 sm:$0x3]
  %v131 = vlaneseq
  %v132 = vshrl.u32 %v131, 7
  %v133 = vsub.s32 0, %v132
  %v134 = vrot.slane %v127, %v133
  %v135 = vlaneseq
  %v136 = vshrl.u32 %v135, 7
  %v137 = vsub.s32 1, %v136
  %v138 = vrot.slane %v127, %v137
  %v141 = vmul.f32 %v125, %v134
  %v142 = vmul.f32 %v126, %v138
  %v144 = vlaneseq
  %v145 = vshrl.u32 %v144, 7
  %v146 = vsub.s32 0, %v145
  %v147 = vrot.slane %v129, %v146
  %v148 = vlaneseq
  %v149 = vshrl.u32 %v148, 7
  %v150 = vsub.s32 1, %v149
  %v151 = vrot.slane %v129, %v150
  %v154 = vadd.f32 %v141, %v147
  %v155 = vadd.f32 %v142, %v151
  %v156 = vld [vmem:[%s4] sm:$0xff]
  %v157 = vld [vmem:[%s4 + $0x8] sm:$0xff]
  %v158 = vld [vmem:[%s4 + $0x10] sm:$0xff]
  %v159 = vld [vmem:[%s4 + $0x18] sm:$0xff]
  %v160 = vld [vmem:[%s4 + $0x20] sm:$0xff]
  %v161 = vld [vmem:[%s4 + $0x28] sm:$0xff]
  %v162 = vld [vmem:[%s4 + $0x30] sm:$0xff]
  %v163 = vld [vmem:[%s4 + $0x38] sm:$0xff]
  %v164 = vld [vmem:[%s4 + $0x40] sm:$0xff]
  %v165 = vld [vmem:[%s4 + $0x48] sm:$0xff]
  %v166 = vld [vmem:[%s4 + $0x50] sm:$0xff]
  %v167 = vld [vmem:[%s4 + $0x58] sm:$0xff]
  %v168 = vld [vmem:[%s4 + $0x60] sm:$0xff]
  %v169 = vld [vmem:[%s4 + $0x68] sm:$0xff]
  %v170 = vld [vmem:[%s4 + $0x70] sm:$0xff]
  %v171 = vld [vmem:[%s4 + $0x78] sm:$0xff]
  %v172 = vld [vmem:[%s4 + $0x80] sm:$0xff]
  %v173 = vld [vmem:[%s4 + $0x88] sm:$0xff]
  %v174 = vld [vmem:[%s4 + $0x90] sm:$0xff]
  %v175 = vld [vmem:[%s4 + $0x98] sm:$0xff]
  %v176 = vld [vmem:[%s4 + $0xa0] sm:$0xff]
  %v177 = vld [vmem:[%s4 + $0xa8] sm:$0xff]
  %v178 = vld [vmem:[%s4 + $0xb0] sm:$0xff]
  %v179 = vld [vmem:[%s4 + $0xb8] sm:$0xff]
  %v180 = vld [vmem:[%s4 + $0xc0] sm:$0xff]
  %v181 = vld [vmem:[%s4 + $0xc8] sm:$0xff]
  %v182 = vld [vmem:[%s4 + $0xd0] sm:$0xff]
  %v183 = vld [vmem:[%s4 + $0xd8] sm:$0xff]
  %v184 = vld [vmem:[%s4 + $0xe0] sm:$0xff]
  %v185 = vld [vmem:[%s4 + $0xe8] sm:$0xff]
  %v186 = vld [vmem:[%s4 + $0xf0] sm:$0xff]
  %v187 = vld [vmem:[%s4 + $0xf8] sm:$0xff]
  %v188 = vld [vmem:[%s4 + $0x100] sm:$0xff]
  %v189 = vld [vmem:[%s4 + $0x108] sm:$0xff]
  %v190 = vld [vmem:[%s4 + $0x110] sm:$0xff]
  %v191 = vld [vmem:[%s4 + $0x118] sm:$0xff]
  %v192 = vld [vmem:[%s4 + $0x120] sm:$0xff]
  %v193 = vld [vmem:[%s4 + $0x128] sm:$0xff]
  %v194 = vld [vmem:[%s4 + $0x130] sm:$0xff]
  %v195 = vld [vmem:[%s4 + $0x138] sm:$0xff]
  %v196 = vld [vmem:[%s4 + $0x140] sm:$0xff]
  %v197 = vld [vmem:[%s4 + $0x148] sm:$0xff]
  %v198 = vld [vmem:[%s4 + $0x150] sm:$0xff]
  %v199 = vld [vmem:[%s4 + $0x158] sm:$0xff]
  %v200 = vld [vmem:[%s4 + $0x160] sm:$0xff]
  %v201 = vld [vmem:[%s4 + $0x168] sm:$0xff]
  %v202 = vld [vmem:[%s4 + $0x170] sm:$0xff]
  %v203 = vld [vmem:[%s4 + $0x178] sm:$0xff]
  %v204 = vld [vmem:[%s4 + $0x180] sm:$0xff]
  %v205 = vld [vmem:[%s4 + $0x188] sm:$0xff]
  %v206 = vld [vmem:[%s4 + $0x190] sm:$0xff]
  %v207 = vld [vmem:[%s4 + $0x198] sm:$0xff]
  %v208 = vld [vmem:[%s4 + $0x1a0] sm:$0xff]
  %v209 = vld [vmem:[%s4 + $0x1a8] sm:$0xff]
  %v210 = vld [vmem:[%s4 + $0x1b0] sm:$0xff]
  %v211 = vld [vmem:[%s4 + $0x1b8] sm:$0xff]
  %v212 = vld [vmem:[%s4 + $0x1c0] sm:$0xff]
  %v213 = vld [vmem:[%s4 + $0x1c8] sm:$0xff]
  %v214 = vld [vmem:[%s4 + $0x1d0] sm:$0xff]
  %v215 = vld [vmem:[%s4 + $0x1d8] sm:$0xff]
  %v216 = vld [vmem:[%s4 + $0x1e0] sm:$0xff]
  %v217 = vld [vmem:[%s4 + $0x1e8] sm:$0xff]
  %v218 = vld [vmem:[%s4 + $0x1f0] sm:$0xff]
  %v219 = vld [vmem:[%s4 + $0x1f8] sm:$0xff]
  %v220 = vld [vmem:[%s5] sm:$0x3]
  %v222 = vlaneseq
  %v223 = vshrl.u32 %v222, 7
  %v224 = vsub.s32 0, %v223
  %v225 = vrot.slane %v220, %v224
  %v226 = vlaneseq
  %v227 = vshrl.u32 %v226, 7
  %v228 = vsub.s32 1, %v227
  %v229 = vrot.slane %v220, %v228
  %232 = vmatprep.subr.mxu0 %v157
  %233 = vmatpush1.msra.mxu0 %v156
  %234 = vmatprep.subr.mxu0 %v159
  %235 = vmatpush1.msra.mxu0 %v158
  %236 = vmatprep.subr.mxu0 %v161
  %237 = vmatpush1.msra.mxu0 %v160
  %238 = vmatprep.subr.mxu0 %v163
  %239 = vmatpush1.msra.mxu0 %v162
  %240 = vmatprep.subr.mxu0 %v165
  %241 = vmatpush1.msra.mxu0 %v164
  %242 = vmatprep.subr.mxu0 %v167
  %243 = vmatpush1.msra.mxu0 %v166
  %244 = vmatprep.subr.mxu0 %v169
  %245 = vmatpush1.msra.mxu0 %v168
  %246 = vmatprep.subr.mxu0 %v171
  %247 = vmatpush1.msra.mxu0 %v170
  %248 = vmatprep.subr.mxu0 %v173
  %249 = vmatpush1.msra.mxu0 %v172
  %250 = vmatprep.subr.mxu0 %v175
  %251 = vmatpush1.msra.mxu0 %v174
  %252 = vmatprep.subr.mxu0 %v177
  %253 = vmatpush1.msra.mxu0 %v176
  %254 = vmatprep.subr.mxu0 %v179
  %255 = vmatpush1.msra.mxu0 %v178
  %256 = vmatprep.subr.mxu0 %v181
  %257 = vmatpush1.msra.mxu0 %v180
  %258 = vmatprep.subr.mxu0 %v183
  %259 = vmatpush1.msra.mxu0 %v182
  %260 = vmatprep.subr.mxu0 %v185
  %261 = vmatpush1.msra.mxu0 %v184
  %262 = vmatprep.subr.mxu0 %v187
  %263 = vmatpush1.msra.mxu0 %v186
  %264 = vmatprep.subr.mxu0 %v189
  %265 = vmatpush1.msra.mxu0 %v188
  %266 = vmatprep.subr.mxu0 %v191
  %267 = vmatpush1.msra.mxu0 %v190
  %268 = vmatprep.subr.mxu0 %v193
  %269 = vmatpush1.msra.mxu0 %v192
  %270 = vmatprep.subr.mxu0 %v195
  %271 = vmatpush1.msra.mxu0 %v194
  %272 = vmatprep.subr.mxu0 %v197
  %273 = vmatpush1.msra.mxu0 %v196
  %274 = vmatprep.subr.mxu0 %v199
  %275 = vmatpush1.msra.mxu0 %v198
  %276 = vmatprep.subr.mxu0 %v201
  %277 = vmatpush1.msra.mxu0 %v200
  %278 = vmatprep.subr.mxu0 %v203
  %279 = vmatpush1.msra.mxu0 %v202
  %280 = vmatprep.subr.mxu0 %v205
  %281 = vmatpush1.msra.mxu0 %v204
  %282 = vmatprep.subr.mxu0 %v207
  %283 = vmatpush1.msra.mxu0 %v206
  %284 = vmatprep.subr.mxu0 %v209
  %285 = vmatpush1.msra.mxu0 %v208
  %286 = vmatprep.subr.mxu0 %v211
  %287 = vmatpush1.msra.mxu0 %v210
  %288 = vmatprep.subr.mxu0 %v213
  %289 = vmatpush1.msra.mxu0 %v212
  %290 = vmatprep.subr.mxu0 %v215
  %291 = vmatpush1.msra.mxu0 %v214
  %292 = vmatprep.subr.mxu0 %v217
  %293 = vmatpush1.msra.mxu0 %v216
  %294 = vmatprep.subr.mxu0 %v219
  %295 = vmatpush1.msra.mxu0 %v218
  %296 = vmatprep.mubr.f32.mxu0 %v155
  %297 = vmatmul.mubr.f32.gmra.mrb[0].mxu0 %v154
  %v298 = vpop.f32.mrb[0].mxu0
  %v299 = vadd.f32 %v225, %v298
  %v300 = vpop.f32.mrb[0].mxu0
  %v301 = vadd.f32 %v229, %v300
  %302 = vdwg.mxu0
  %v303 = vmax.f32 %v299, 0.0
  %v304 = vmax.f32 %v301, 0.0
  %305 = vmatprep.subr.mxu0 %v157
  %306 = vmatpush1.msra.mxu0 %v156
  %307 = vmatprep.subr.mxu0 %v159
  %308 = vmatpush1.msra.mxu0 %v158
  %309 = vmatprep.subr.mxu0 %v161
  %310 = vmatpush1.msra.mxu0 %v160
  %311 = vmatprep.subr.mxu0 %v163
  %312 = vmatpush1.msra.mxu0 %v162
  %313 = vmatprep.subr.mxu0 %v165
  %314 = vmatpush1.msra.mxu0 %v164
  %315 = vmatprep.subr.mxu0 %v167
  %316 = vmatpush1.msra.mxu0 %v166
  %317 = vmatprep.subr.mxu0 %v169
  %318 = vmatpush1.msra.mxu0 %v168
  %319 = vmatprep.subr.mxu0 %v171
  %320 = vmatpush1.msra.mxu0 %v170
  %321 = vmatprep.subr.mxu0 %v173
  %322 = vmatpush1.msra.mxu0 %v172
  %323 = vmatprep.subr.mxu0 %v175
  %324 = vmatpush1.msra.mxu0 %v174
  %325 = vmatprep.subr.mxu0 %v177
  %326 = vmatpush1.msra.mxu0 %v176
  %327 = vmatprep.subr.mxu0 %v179
  %328 = vmatpush1.msra.mxu0 %v178
  %329 = vmatprep.subr.mxu0 %v181
  %330 = vmatpush1.msra.mxu0 %v180
  %331 = vmatprep.subr.mxu0 %v183
  %332 = vmatpush1.msra.mxu0 %v182
  %333 = vmatprep.subr.mxu0 %v185
  %334 = vmatpush1.msra.mxu0 %v184
  %335 = vmatprep.subr.mxu0 %v187
  %336 = vmatpush1.msra.mxu0 %v186
  %337 = vmatprep.subr.mxu0 %v189
  %338 = vmatpush1.msra.mxu0 %v188
  %339 = vmatprep.subr.mxu0 %v191
  %340 = vmatpush1.msra.mxu0 %v190
  %341 = vmatprep.subr.mxu0 %v193
  %342 = vmatpush1.msra.mxu0 %v192
  %343 = vmatprep.subr.mxu0 %v195
  %344 = vmatpush1.msra.mxu0 %v194
  %345 = vmatprep.subr.mxu0 %v197
  %346 = vmatpush1.msra.mxu0 %v196
  %347 = vmatprep.subr.mxu0 %v199
  %348 = vmatpush1.msra.mxu0 %v198
  %349 = vmatprep.subr.mxu0 %v201
  %350 = vmatpush1.msra.mxu0 %v200
  %351 = vmatprep.subr.mxu0 %v203
  %352 = vmatpush1.msra.mxu0 %v202
  %353 = vmatprep.subr.mxu0 %v205
  %354 = vmatpush1.msra.mxu0 %v204
  %355 = vmatprep.subr.mxu0 %v207
  %356 = vmatpush1.msra.mxu0 %v206
  %357 = vmatprep.subr.mxu0 %v209
  %358 = vmatpush1.msra.mxu0 %v208
  %359 = vmatprep.subr.mxu0 %v211
  %360 = vmatpush1.msra.mxu0 %v210
  %361 = vmatprep.subr.mxu0 %v213
  %362 = vmatpush1.msra.mxu0 %v212
  %363 = vmatprep.subr.mxu0 %v215
  %364 = vmatpush1.msra.mxu0 %v214
  %365 = vmatprep.subr.mxu0 %v217
  %366 = vmatpush1.msra.mxu0 %v216
  %367 = vmatprep.subr.mxu0 %v219
  %368 = vmatpush1.msra.mxu0 %v218
  %369 = vmatprep.mubr.f32.mxu0 %v304
  %370 = vmatmul.mubr.f32.gmra.mrb[0].mxu0 %v303
  %v371 = vpop.f32.mrb[0].mxu0
  %v372 = vadd.f32 %v225, %v371
  %v373 = vpop.f32.mrb[0].mxu0
  %v374 = vadd.f32 %v229, %v373
  %375 = vdwg.mxu0
  %v376 = vmax.f32 %v372, 0.0
  %v377 = vmax.f32 %v374, 0.0
  %v378 = vld [vmem:[%s6] sm:$0xff]
  %v379 = vld [vmem:[%s6 + $0x8] sm:$0xff]
  %v380 = vld [vmem:[%s6 + $0x10] sm:$0xff]
  %v381 = vld [vmem:[%s6 + $0x18] sm:$0xff]
  %v382 = vld [vmem:[%s6 + $0x20] sm:$0xff]
  %v383 = vld [vmem:[%s6 + $0x28] sm:$0xff]
  %v384 = vld [vmem:[%s6 + $0x30] sm:$0xff]
  %v385 = vld [vmem:[%s6 + $0x38] sm:$0xff]
  %v386 = vld [vmem:[%s6 + $0x40] sm:$0xff]
  %v387 = vld [vmem:[%s6 + $0x48] sm:$0xff]
  %v388 = vld [vmem:[%s6 + $0x50] sm:$0xff]
  %v389 = vld [vmem:[%s6 + $0x58] sm:$0xff]
  %v390 = vld [vmem:[%s6 + $0x60] sm:$0xff]
  %v391 = vld [vmem:[%s6 + $0x68] sm:$0xff]
  %v392 = vld [vmem:[%s6 + $0x70] sm:$0xff]
  %v393 = vld [vmem:[%s6 + $0x78] sm:$0xff]
  %v394 = vld [vmem:[%s6 + $0x80] sm:$0xff]
  %v395 = vld [vmem:[%s6 + $0x88] sm:$0xff]
  %v396 = vld [vmem:[%s6 + $0x90] sm:$0xff]
  %v397 = vld [vmem:[%s6 + $0x98] sm:$0xff]
  %v398 = vld [vmem:[%s6 + $0xa0] sm:$0xff]
  %v399 = vld [vmem:[%s6 + $0xa8] sm:$0xff]
  %v400 = vld [vmem:[%s6 + $0xb0] sm:$0xff]
  %v401 = vld [vmem:[%s6 + $0xb8] sm:$0xff]
  %v402 = vld [vmem:[%s6 + $0xc0] sm:$0xff]
  %v403 = vld [vmem:[%s6 + $0xc8] sm:$0xff]
  %v404 = vld [vmem:[%s6 + $0xd0] sm:$0xff]
  %v405 = vld [vmem:[%s6 + $0xd8] sm:$0xff]
  %v406 = vld [vmem:[%s6 + $0xe0] sm:$0xff]
  %v407 = vld [vmem:[%s6 + $0xe8] sm:$0xff]
  %v408 = vld [vmem:[%s6 + $0xf0] sm:$0xff]
  %v409 = vld [vmem:[%s6 + $0xf8] sm:$0xff]
  %v410 = vld [vmem:[%s7] sm:$0x1]
  %v412 = vlaneseq
  %v413 = vshrl.u32 %v412, 7
  %v414 = vsub.s32 0, %v413
  %v415 = vrot.slane %v410, %v414
  %417 = vmatprep.subr.mxu0 0.0
  %418 = vmatpush1.msra.mxu0 %v378
  %419 = vmatprep.subr.mxu0 0.0
  %420 = vmatpush1.msra.mxu0 %v379
  %421 = vmatprep.subr.mxu0 0.0
  %422 = vmatpush1.msra.mxu0 %v380
  %423 = vmatprep.subr.mxu0 0.0
  %424 = vmatpush1.msra.mxu0 %v381
  %425 = vmatprep.subr.mxu0 0.0
  %426 = vmatpush1.msra.mxu0 %v382
  %427 = vmatprep.subr.mxu0 0.0
  %428 = vmatpush1.msra.mxu0 %v383
  %429 = vmatprep.subr.mxu0 0.0
  %430 = vmatpush1.msra.mxu0 %v384
  %431 = vmatprep.subr.mxu0 0.0
  %432 = vmatpush1.msra.mxu0 %v385
  %433 = vmatprep.subr.mxu0 0.0
  %434 = vmatpush1.msra.mxu0 %v386
  %435 = vmatprep.subr.mxu0 0.0
  %436 = vmatpush1.msra.mxu0 %v387
  %437 = vmatprep.subr.mxu0 0.0
  %438 = vmatpush1.msra.mxu0 %v388
  %439 = vmatprep.subr.mxu0 0.0
  %440 = vmatpush1.msra.mxu0 %v389
  %441 = vmatprep.subr.mxu0 0.0
  %442 = vmatpush1.msra.mxu0 %v390
  %443 = vmatprep.subr.mxu0 0.0
  %444 = vmatpush1.msra.mxu0 %v391
  %445 = vmatprep.subr.mxu0 0.0
  %446 = vmatpush1.msra.mxu0 %v392
  %447 = vmatprep.subr.mxu0 0.0
  %448 = vmatpush1.msra.mxu0 %v393
  %449 = vmatprep.subr.mxu0 0.0
  %450 = vmatpush1.msra.mxu0 %v394
  %451 = vmatprep.subr.mxu0 0.0
  %452 = vmatpush1.msra.mxu0 %v395
  %453 = vmatprep.subr.mxu0 0.0
  %454 = vmatpush1.msra.mxu0 %v396
  %455 = vmatprep.subr.mxu0 0.0
  %456 = vmatpush1.msra.mxu0 %v397
  %457 = vmatprep.subr.mxu0 0.0
  %458 = vmatpush1.msra.mxu0 %v398
  %459 = vmatprep.subr.mxu0 0.0
  %460 = vmatpush1.msra.mxu0 %v399
  %461 = vmatprep.subr.mxu0 0.0
  %462 = vmatpush1.msra.mxu0 %v400
  %463 = vmatprep.subr.mxu0 0.0
  %464 = vmatpush1.msra.mxu0 %v401
  %465 = vmatprep.subr.mxu0 0.0
  %466 = vmatpush1.msra.mxu0 %v402
  %467 = vmatprep.subr.mxu0 0.0
  %468 = vmatpush1.msra.mxu0 %v403
  %469 = vmatprep.subr.mxu0 0.0
  %470 = vmatpush1.msra.mxu0 %v404
  %471 = vmatprep.subr.mxu0 0.0
  %472 = vmatpush1.msra.mxu0 %v405
  %473 = vmatprep.subr.mxu0 0.0
  %474 = vmatpush1.msra.mxu0 %v406
  %475 = vmatprep.subr.mxu0 0.0
  %476 = vmatpush1.msra.mxu0 %v407
  %477 = vmatprep.subr.mxu0 0.0
  %478 = vmatpush1.msra.mxu0 %v408
  %479 = vmatprep.subr.mxu0 0.0
  %480 = vmatpush1.msra.mxu0 %v409
  %481 = vmatprep.mubr.f32.mxu0 %v377
  %482 = vmatmul.mubr.f32.gmra.mrb[0].mxu0 %v376
  %v483 = vpop.f32.mrb[0].mxu0
  %v484 = vadd.f32 %v415, %v483
  %v485 = vpop.f32.mrb[0].mxu0
  %486 = vdwg.mxu0
  %487 = vst [vmem:[%s8] sm:$0xff] %v484
  // Predicated region
  $region34: #{building_footprint_forward.1} parent=0 // pred_check
    _
  $region35: #{building_footprint_forward.1} parent=0 // pred_check_branch
    %489 = sbr.rel (0) target = $region37
  $region36: #{building_footprint_forward.1} parent=0 // pred_region
    _
  $region37: #{building_footprint_forward.1} parent=0 // pred_fallthru
    _
  // Predicated region
  $region38: #{building_footprint_forward.1} parent=0 // pred_check
    _
  $region39: #{building_footprint_forward.1} parent=0 // pred_check_branch
    %491 = sbr.rel (0) target = $region41
  $region40: #{building_footprint_forward.1} parent=0 // pred_region
    _
  $region41: #{building_footprint_forward.1} parent=0 // pred_fallthru
    _

</llo_original>
